<compile_context>
chip_gen: v5e
topology: v5e:2x2
jax: 0.10.0
libtpu: 0.0.40
codegen_flags: <defaults>
</compile_context>

<pallas_src>
import functools

import jax
import jax.numpy as jnp
from jax.experimental import pallas as pl
from jax.experimental.pallas import tpu as pltpu


def _dynamics_back_kernel(x_ref, w_ref, o_ref):
    # One row tile; weight fully resident in VMEM.  y = x @ W on the MXU.
    o_ref[...] = jnp.dot(
        x_ref[...], w_ref[...], preferred_element_type=jnp.float32
    ).astype(o_ref.dtype)


def _round_up(n, m):
    return ((n + m - 1) // m) * m


@functools.partial(jax.jit, static_argnames=("b", "tile_rows"))
def dynamics_back_forward(x, w_back_t, *, b, tile_rows=512):
    """Pallas equivalent of dynamics_back.forward.

    x:        any shape (..., b)
    w_back_t: (b, b) weight stored transposed vs PyTorch, i.e. (in, out) = pinv(W_dyn).T
    returns:  same shape as x, float32
    """
    orig_shape = x.shape
    rows = x.size // b

    # --- lane packing: P logical rows per 128-lane row (block-diagonal weight) ----
    if (b < 128) and (128 % b == 0) and (rows > 0) and (rows % (128 // b) == 0):
        P = 128 // b
    else:
        P = 1  # fallback: plain (rows, b) @ (b, b)
    K = P * b
    packed_rows = rows // P

    xp = x.reshape(packed_rows, K).astype(jnp.float32)  # free contiguous reshape
    w = w_back_t.astype(jnp.float32)
    if P > 1:
        # block-diag(P copies of W): kron(I_P, W)[(p*b+i),(q*b+o)] = delta_pq * W[i,o]
        wp = jnp.kron(jnp.eye(P, dtype=jnp.float32), w)  # (K, K), <= 64 KiB
    else:
        wp = w

    # --- tiling -------------------------------------------------------------------
    tr = _round_up(min(tile_rows, _round_up(max(packed_rows, 1), 8)), 8)
    grid = (pl.cdiv(packed_rows, tr),)

    cost = pl.CostEstimate(
        flops=2 * packed_rows * K * K,
        transcendentals=0,
        bytes_accessed=4 * (2 * packed_rows * K + K * K),
    )

    out = pl.pallas_call(
        _dynamics_back_kernel,
        out_shape=jax.ShapeDtypeStruct((packed_rows, K), jnp.float32),
        grid_spec=pltpu.PrefetchScalarGridSpec(
            num_scalar_prefetch=0,
            grid=grid,
            in_specs=[
                pl.BlockSpec((tr, K), lambda i: (i, 0)),   # x row tile
                pl.BlockSpec((K, K), lambda i: (0, 0)),    # weight (constant block, tiny)
            ],
            out_specs=pl.BlockSpec((tr, K), lambda i: (i, 0)),  # lane-dense when packed
        ),
        compiler_params=pltpu.CompilerParams(
            dimension_semantics=("parallel",),  # row tiles shard across TCs (v7x megacore)
        ),
        cost_estimate=cost,
    )(xp, wp)

    return out.reshape(orig_shape)


def init_dynamics_back_weight(key, b):
    """Mirror the PyTorch __init__: weight = pinverse(omega.dynamics.weight).

    Returns the weight transposed to (in_features, out_features) so the kernel
    computes y = x @ W directly (equivalent to PyTorch's x @ weight.T).
    """
    # Deterministic, well-conditioned example "forward dynamics" weight.
    w_dyn = jnp.eye(b, dtype=jnp.float32) + 0.3 * jax.random.normal(
        key, (b, b), dtype=jnp.float32
    )
    w_back = jnp.linalg.pinv(w_dyn)  # (out, in), PyTorch convention
    return w_back.T                  # (in, out)


def dynamics_back_ref(x, w_back_t, *, b):
    """Pure-JAX reference (mirrors the PyTorch forward)."""
    y = x.reshape(-1, b).astype(jnp.float32) @ w_back_t.astype(jnp.float32)
    return y.reshape(x.shape)


if __name__ == "__main__":
    b_dim = 8
    key = jax.random.PRNGKey(0)
    wkey, xkey1, xkey2 = jax.random.split(key, 3)

    w_back_t = init_dynamics_back_weight(wkey, b_dim)

    # Case 1: rows divisible by the lane-packing factor (packed, 128-lane-dense path).
    x1 = jax.random.normal(xkey1, (2, 16, b_dim), dtype=jnp.float32)  # rows = 32
    y1 = jax.block_until_ready(dynamics_back_forward(x1, w_back_t, b=b_dim))
    r1 = dynamics_back_ref(x1, w_back_t, b=b_dim)
    assert y1.shape == x1.shape, y1.shape
    assert jnp.allclose(y1, r1, atol=1e-4, rtol=1e-4), float(jnp.max(jnp.abs(y1 - r1)))

    # Case 2: rows NOT divisible by 128//b -> unpacked fallback; ragged last block
    # handled by Pallas (no wrapper-side pad / slice).
    x2 = jax.random.normal(xkey2, (2, 5, b_dim), dtype=jnp.float32)   # rows = 10
    y2 = jax.block_until_ready(dynamics_back_forward(x2, w_back_t, b=b_dim))
    r2 = dynamics_back_ref(x2, w_back_t, b=b_dim)
    assert y2.shape == x2.shape, y2.shape
    assert jnp.allclose(y2, r2, atol=1e-4, rtol=1e-4), float(jnp.max(jnp.abs(y2 - r2)))

    print("KERNEL_OK")
</pallas_src>

<mosaic_0001>
module attributes {stable_mosaic.version = 11 : i64} {
  func.func @_dynamics_back_kernel(%arg0: i32, %arg1: memref<8x128xf32, #tpu.memory_space<vmem>>, %arg2: memref<128x128xf32, #tpu.memory_space<vmem>>, %arg3: memref<8x128xf32, #tpu.memory_space<vmem>>) attributes {dimension_semantics = [#tpu.dimension_semantics<parallel>], iteration_bounds = array<i64: 1>, scalar_prefetch = 0 : i64, scratch_operands = 0 : i64, tpu.core_type = #tpu.core_type<tc>, window_params = [{transform_indices = @transform_0, window_bounds = array<i64: 8, 128>}, {pipeline_mode = #tpu.pipeline_mode<synchronous>, transform_indices = @transform_1, window_bounds = array<i64: 128, 128>}, {transform_indices = @transform_2, window_bounds = array<i64: 8, 128>}]} {
    %c0 = arith.constant 0 : index
    %c0_0 = arith.constant 0 : index
    %0 = vector.load %arg1[%c0, %c0_0] : memref<8x128xf32, #tpu.memory_space<vmem>>, vector<8x128xf32>
    %c0_1 = arith.constant 0 : index
    %c0_2 = arith.constant 0 : index
    %1 = vector.load %arg2[%c0_1, %c0_2] : memref<128x128xf32, #tpu.memory_space<vmem>>, vector<128x128xf32>
    %cst = arith.constant dense<0.000000e+00> : vector<8x128xf32>
    %2 = tpu.matmul %0, %1, %cst {dimension_numbers = #tpu.dot_dimension_numbers<[1], [0], [0], [1], [0, 0, 1, 1], [], []>} : vector<8x128xf32>, vector<128x128xf32>, vector<8x128xf32> -> vector<8x128xf32>
    %c0_3 = arith.constant 0 : index
    %c0_4 = arith.constant 0 : index
    %3 = vector.load %arg3[%c0_3, %c0_4] : memref<8x128xf32, #tpu.memory_space<vmem>>, vector<8x128xf32>
    tpu.vector_store %arg3[%c0_3, %c0_4], %2 {strides = array<i32>} : memref<8x128xf32, #tpu.memory_space<vmem>>, vector<8x128xf32>,
    return
  }
  func.func @transform_0(%arg0: i32) -> (i32, i32) {
    %c0_i32 = arith.constant 0 : i32
    %c0_i32_0 = arith.constant 0 : i32
    return %arg0, %c0_i32 : i32, i32
  }
  func.func @transform_1(%arg0: i32) -> (i32, i32) {
    %c0_i32 = arith.constant 0 : i32
    %c0_i32_0 = arith.constant 0 : i32
    %c0_i32_1 = arith.constant 0 : i32
    return %c0_i32, %c0_i32_0 : i32, i32
  }
  func.func @transform_2(%arg0: i32) -> (i32, i32) {
    %c0_i32 = arith.constant 0 : i32
    %c0_i32_0 = arith.constant 0 : i32
    return %arg0, %c0_i32 : i32, i32
  }
}

</mosaic_0001>

<llo_original>
// kernel: dynamics_back_forward.1
$region0: #{dynamics_back_forward.1}
  #allocation0 [shape = 'u32[]', space=smem, size = 0x4, offset = 0x4, fixed_abs, tag = 'smem constant byte address 0x4 - core index']
  #allocation1 [shape = 'u32[72,128]{1,0:T(1,128)}', space=vmem, size = 0x9000, scoped, tag = 'internal scratch']
  %s0 = inlined_call_operand.vmem [shape: f32[2,128], index: 0, kind: input, shape index: {}]
  %s1 = inlined_call_operand.vmem [shape: f32[128,128], index: 1, kind: input, shape index: {}]
  %s2 = inlined_call_operand.vmem [shape: f32[2,128], index: 2, kind: output, shape index: {}]
  %s3 = sld [smem:[#allocation0]]
  $region48: #{dynamics_back_forward.1} parent=0
    _
  %s5 = ssub.s32 1, %s3
  %s6 = scalar_select 0, %s5, %s3
  $region1: #{dynamics_back_forward.1} parent=0
    #allocation2 [shape = 'u8[4096]{0}', space=vmem, size = 0x1000, scoped, tag = 'output window, operand 0, single buffered']
    // Predicated region
    $region2: #{dynamics_back_forward.1} parent=1 // pred_check
      _
    $region3: #{dynamics_back_forward.1} parent=1 // pred_check_branch
      %8 = sbr.rel (0) target = $region5
    $region4: #{dynamics_back_forward.1} parent=1 // pred_region
      _
    $region5: #{dynamics_back_forward.1} parent=1 // pred_fallthru
      _
    // Predicated region
    $region6: #{dynamics_back_forward.1} parent=1 // pred_check
      _
    $region7: #{dynamics_back_forward.1} parent=1 // pred_check_branch
      %10 = sbr.rel (0) target = $region9
    $region8: #{dynamics_back_forward.1} parent=1 // pred_region
      _
    $region9: #{dynamics_back_forward.1} parent=1 // pred_fallthru
      _
    %v11 = vld [vmem:[%s0] sm:$0xff]
    %v12 = vld [vmem:[%s1] sm:$0xff]
    %v13 = vld [vmem:[%s1 + $0x8] sm:$0xff]
    %v14 = vld [vmem:[%s1 + $0x10] sm:$0xff]
    %v15 = vld [vmem:[%s1 + $0x18] sm:$0xff]
    %v16 = vld [vmem:[%s1 + $0x20] sm:$0xff]
    %v17 = vld [vmem:[%s1 + $0x28] sm:$0xff]
    %v18 = vld [vmem:[%s1 + $0x30] sm:$0xff]
    %v19 = vld [vmem:[%s1 + $0x38] sm:$0xff]
    %v20 = vld [vmem:[%s1 + $0x40] sm:$0xff]
    %v21 = vld [vmem:[%s1 + $0x48] sm:$0xff]
    %v22 = vld [vmem:[%s1 + $0x50] sm:$0xff]
    %v23 = vld [vmem:[%s1 + $0x58] sm:$0xff]
    %v24 = vld [vmem:[%s1 + $0x60] sm:$0xff]
    %v25 = vld [vmem:[%s1 + $0x68] sm:$0xff]
    %v26 = vld [vmem:[%s1 + $0x70] sm:$0xff]
    %v27 = vld [vmem:[%s1 + $0x78] sm:$0xff]
    %28 = vmatpush.msra.mxu0 %v27
    %29 = vmatpush.msra.mxu0 %v26
    %30 = vmatpush.msra.mxu0 %v25
    %31 = vmatpush.msra.mxu0 %v24
    %32 = vmatpush.msra.mxu0 %v23
    %33 = vmatpush.msra.mxu0 %v22
    %34 = vmatpush.msra.mxu0 %v21
    %35 = vmatpush.msra.mxu0 %v20
    %36 = vmatpush.msra.mxu0 %v19
    %37 = vmatpush.msra.mxu0 %v18
    %38 = vmatpush.msra.mxu0 %v17
    %39 = vmatpush.msra.mxu0 %v16
    %40 = vmatpush.msra.mxu0 %v15
    %41 = vmatpush.msra.mxu0 %v14
    %42 = vmatpush.msra.mxu0 %v13
    %43 = vmatpush.msra.mxu0 %v12
    %44 = vmatmul.f32.gmra.mxu0 %v11
    %v45 = vpop.f32.mrf.mxu0
    %v46 = vadd.f32 0.0, %v45
    %47 = vdwg.mxu0
    %48 = vst [vmem:[#allocation2] sm:$0xff] %v46
    // Predicated region
    $region10: #{dynamics_back_forward.1} parent=1 // pred_check
      _
    $region11: #{dynamics_back_forward.1} parent=1 // pred_check_branch
      %50 = sbr.rel (0) target = $region13
    $region12: #{dynamics_back_forward.1} parent=1 // pred_region
      // Predicated region
      $region14: #{dynamics_back_forward.1} parent=12 // pred_check
        _
      $region15: #{dynamics_back_forward.1} parent=12 // pred_check_branch
        %52 = sbr.rel (0) target = $region17
      $region16: #{dynamics_back_forward.1} parent=12 // pred_region
        // Predicated region
        $region18: #{dynamics_back_forward.1} parent=16 // pred_check
          _
        $region19: #{dynamics_back_forward.1} parent=16 // pred_check_branch
          %54 = sbr.rel target = $region21
        $region20: #{dynamics_back_forward.1} parent=16 // pred_region
          // Predicated region
          $region33: #{dynamics_back_forward.1} parent=20 // pred_check
            _
          $region34: #{dynamics_back_forward.1} parent=20 // pred_check_branch
            %70 = sbr.rel (0) target = $region36
          $region35: #{dynamics_back_forward.1} parent=20 // pred_region
            %s72 = ssub.s32 4, 1
            loop: start=0, step=1, limit=1
            $region37: #{dynamics_back_forward.1} parent=35 // loop_pre_header
              _
            $region38: #{dynamics_back_forward.1} parent=35 // loop_header
              %s74 = sphi 0, %s78
              %p75 = scmp.ge.s32.totalorder %s74, 1
              %s79 = sphi [#allocation2], [#allocation2]
              %s80 = sphi %s2, %s2
            $region39: #{dynamics_back_forward.1} parent=35 // loop_header_branch
              %77 = sbr.rel (%p75) target = $region43
            $region40: #{dynamics_back_forward.1} parent=35 // loop_body
              %v81 = vld [vmem:[%s79] sm:%s72]
              %82 = vst [vmem:[%s80] sm:%s72] %v81
            $region41: #{dynamics_back_forward.1} parent=35 // loop_footer
              %s78 = sadd.s32 1, %s74
            $region42: #{dynamics_back_forward.1} parent=35 // loop_footer_branch
              %73 = sbr.rel target = $region38
            $region43: #{dynamics_back_forward.1} parent=35 // loop_exit
              _
          $region36: #{dynamics_back_forward.1} parent=20 // pred_fallthru
            _
        $region21: #{dynamics_back_forward.1} parent=16 // pred_fallthru
          _
        // Predicated region
        $region22: #{dynamics_back_forward.1} parent=16 // pred_check
          _
        $region23: #{dynamics_back_forward.1} parent=16 // pred_check_branch
          %56 = sbr.rel (0) target = $region25
        $region24: #{dynamics_back_forward.1} parent=16 // pred_region
          %s58 = ssub.s32 4, 1
          loop: start=0, step=1, limit=1
          $region26: #{dynamics_back_forward.1} parent=24 // loop_pre_header
            _
          $region27: #{dynamics_back_forward.1} parent=24 // loop_header
            %s60 = sphi 0, %s64
            %p61 = scmp.ge.s32.totalorder %s60, 1
            %s65 = sphi [#allocation2], [#allocation2]
            %s66 = sphi %s2, %s2
          $region28: #{dynamics_back_forward.1} parent=24 // loop_header_branch
            %63 = sbr.rel (%p61) target = $region32
          $region29: #{dynamics_back_forward.1} parent=24 // loop_body
            %v67 = vld [vmem:[%s65] sm:%s58]
            %68 = vst [vmem:[%s66] sm:%s58] %v67
          $region30: #{dynamics_back_forward.1} parent=24 // loop_footer
            %s64 = sadd.s32 1, %s60
          $region31: #{dynamics_back_forward.1} parent=24 // loop_footer_branch
            %59 = sbr.rel target = $region27
          $region32: #{dynamics_back_forward.1} parent=24 // loop_exit
            _
        $region25: #{dynamics_back_forward.1} parent=16 // pred_fallthru
          _
      $region17: #{dynamics_back_forward.1} parent=12 // pred_fallthru
        _
      %83 = vnop
    $region13: #{dynamics_back_forward.1} parent=1 // pred_fallthru
      _
    // Predicated region
    $region44: #{dynamics_back_forward.1} parent=1 // pred_check
      _
    $region45: #{dynamics_back_forward.1} parent=1 // pred_check_branch
      %85 = sbr.rel (0) target = $region47
    $region46: #{dynamics_back_forward.1} parent=1 // pred_region
      _
    $region47: #{dynamics_back_forward.1} parent=1 // pred_fallthru
      _

</llo_original>
